<compile_context>
chip_gen: v6e
topology: v6e:2x2x1
jax: 0.10.0
libtpu: 0.0.40
codegen_flags: <defaults>
</compile_context>

<pallas_src>
import functools

import jax
import jax.numpy as jnp
from jax.experimental import pallas as pl
from jax.experimental.pallas import tpu as pltpu


def _round_up(v, m):
    return (v + m - 1) // m * m


# -----------------------------------------------------------------------------
# Fused Pallas kernel: entire MLP in one invocation (weights resident in VMEM)
# -----------------------------------------------------------------------------
def _fused_mlp_kernel(*refs, num_hidden):
    """refs = (x_ref, w0, b0, ..., w_{H-1}, b_{H-1}, out_w, out_b, o_ref)."""
    x_ref, o_ref = refs[0], refs[-1]
    p = refs[1:-1]

    h = x_ref[...]                                     # (tm, K) f32
    for li in range(num_hidden):                       # unrolled layer loop
        w = p[2 * li][...]
        b = p[2 * li + 1][...]
        h = jnp.maximum(
            jnp.dot(h, w, preferred_element_type=jnp.float32) + b, 0.0)

    out_w, out_b = p[-2][...], p[-1][...]
    o_ref[...] = (jnp.dot(h, out_w, preferred_element_type=jnp.float32)
                  + out_b).astype(o_ref.dtype)


# -----------------------------------------------------------------------------
# Parameter init (mirrors PyTorch nn.Linear defaults) + one-time preparation
# -----------------------------------------------------------------------------
def init_uci_census_params(key, input_size, output_size=3, num_layers=1,
                           hidden_size=50):
    """linears = [Linear(input, hidden)] + [Linear(hidden, hidden)]*(num_layers-2)
       out     = Linear(hidden, output_size)
       Init: U(-1/sqrt(fan_in), 1/sqrt(fan_in)) for weights and biases."""
    def linear_init(k, fan_in, fan_out):
        kw, kb = jax.random.split(k)
        bound = 1.0 / (fan_in ** 0.5)
        w = jax.random.uniform(kw, (fan_in, fan_out), jnp.float32, -bound, bound)
        b = jax.random.uniform(kb, (fan_out,), jnp.float32, -bound, bound)
        return w, b

    n_hidden = 1 + max(0, num_layers - 2)
    keys = jax.random.split(key, n_hidden + 1)
    hidden = [linear_init(keys[0], input_size, hidden_size)]
    for i in range(1, n_hidden):
        hidden.append(linear_init(keys[i], hidden_size, hidden_size))
    out_w, out_b = linear_init(keys[-1], hidden_size, output_size)
    return {"hidden": hidden, "out_w": out_w, "out_b": out_b}


def prepare_params(params):
    """One-time prep: f32 cast + (1, N) biases so the forward emits no glue HLOs."""
    flat = []
    for w, b in params["hidden"]:
        flat.append(w.astype(jnp.float32))
        flat.append(b.astype(jnp.float32).reshape(1, -1))
    flat.append(params["out_w"].astype(jnp.float32))
    flat.append(params["out_b"].astype(jnp.float32).reshape(1, -1))
    return tuple(flat)


# -----------------------------------------------------------------------------
# Forward: flatten + single fused pallas_call
# -----------------------------------------------------------------------------
def uci_census_forward(x_input, flat_params, *, tm_max=256):
    x = x_input.reshape(x_input.shape[0], -1).astype(jnp.float32)  # flatten(start_dim=1)
    M, K = x.shape
    num_hidden = (len(flat_params) - 2) // 2
    out_size = flat_params[-1].shape[-1]

    if M <= tm_max:
        tm, Mp = M, M            # single batch block: full-array dims are exempt
    else:                        # large batch: 256-row blocks, parallel over cores
        tm = tm_max
        Mp = _round_up(M, tm)
        x = jnp.pad(x, ((0, Mp - M), (0, 0)))

    grid = (Mp // tm,)

    in_specs = [pl.BlockSpec((tm, K), lambda i: (i, 0))]
    for prm in flat_params:      # weights/biases: full-array blocks, resident in VMEM
        in_specs.append(pl.BlockSpec(prm.shape, lambda i: (0, 0)))

    out = pl.pallas_call(
        functools.partial(_fused_mlp_kernel, num_hidden=num_hidden),
        out_shape=jax.ShapeDtypeStruct((Mp, out_size), jnp.float32),
        grid=grid,
        in_specs=in_specs,
        out_specs=pl.BlockSpec((tm, out_size), lambda i: (i, 0)),
        compiler_params=pltpu.CompilerParams(
            dimension_semantics=("parallel",)),
    )(x, *flat_params)

    return out[:M] if Mp != M else out


def _reference_forward(x_input, params):
    """Pure-JAX f32 reference."""
    x = x_input.reshape(x_input.shape[0], -1).astype(jnp.float32)
    for w, b in params["hidden"]:
        x = jnp.maximum(jnp.dot(x, w) + b, 0.0)
    return jnp.dot(x, params["out_w"]) + params["out_b"]


# -----------------------------------------------------------------------------
if __name__ == "__main__":
    key = jax.random.PRNGKey(0)
    kx, kp = jax.random.split(key)

    batch, f0, f1 = 2, 4, 8           # forward flattens -> input_size = 32
    input_size = f0 * f1
    hidden_size = 50                  # module default
    output_size = 3
    num_layers = 3                    # two Linear+ReLU layers, then output Linear

    x = jax.random.normal(kx, (batch, f0, f1), jnp.float32)
    params = init_uci_census_params(kp, input_size, output_size=output_size,
                                    num_layers=num_layers, hidden_size=hidden_size)
    flat_params = prepare_params(params)   # one-time prep, outside the forward path

    fwd = jax.jit(lambda inp: uci_census_forward(inp, flat_params))
    out = fwd(x)
    jax.block_until_ready(out)

    assert out.shape == (batch, output_size), out.shape
    assert bool(jnp.all(jnp.isfinite(out)))

    ref = _reference_forward(x, params)
    assert bool(jnp.allclose(out, ref, atol=2e-3, rtol=2e-3)), (out, ref)

    print("KERNEL_OK")
</pallas_src>

<mosaic_0001>
module attributes {stable_mosaic.version = 11 : i64} {
  func.func @_fused_mlp_kernel(%arg0: i32, %arg1: memref<2x32xf32, #tpu.memory_space<vmem>>, %arg2: memref<32x50xf32, #tpu.memory_space<vmem>>, %arg3: memref<1x50xf32, #tpu.memory_space<vmem>>, %arg4: memref<50x50xf32, #tpu.memory_space<vmem>>, %arg5: memref<1x50xf32, #tpu.memory_space<vmem>>, %arg6: memref<50x3xf32, #tpu.memory_space<vmem>>, %arg7: memref<1x3xf32, #tpu.memory_space<vmem>>, %arg8: memref<2x3xf32, #tpu.memory_space<vmem>>) attributes {dimension_semantics = [#tpu.dimension_semantics<parallel>], iteration_bounds = array<i64: 1>, scalar_prefetch = 0 : i64, scratch_operands = 0 : i64, tpu.core_type = #tpu.core_type<tc>, window_params = [{transform_indices = @transform_0, window_bounds = array<i64: 2, 32>}, {pipeline_mode = #tpu.pipeline_mode<synchronous>, transform_indices = @transform_1, window_bounds = array<i64: 32, 50>}, {pipeline_mode = #tpu.pipeline_mode<synchronous>, transform_indices = @transform_2, window_bounds = array<i64: 1, 50>}, {pipeline_mode = #tpu.pipeline_mode<synchronous>, transform_indices = @transform_3, window_bounds = array<i64: 50, 50>}, {pipeline_mode = #tpu.pipeline_mode<synchronous>, transform_indices = @transform_4, window_bounds = array<i64: 1, 50>}, {pipeline_mode = #tpu.pipeline_mode<synchronous>, transform_indices = @transform_5, window_bounds = array<i64: 50, 3>}, {pipeline_mode = #tpu.pipeline_mode<synchronous>, transform_indices = @transform_6, window_bounds = array<i64: 1, 3>}, {transform_indices = @transform_7, window_bounds = array<i64: 2, 3>}]} {
    %c0 = arith.constant 0 : index
    %c0_0 = arith.constant 0 : index
    %0 = vector.load %arg1[%c0, %c0_0] : memref<2x32xf32, #tpu.memory_space<vmem>>, vector<2x32xf32>
    %c0_1 = arith.constant 0 : index
    %c0_2 = arith.constant 0 : index
    %1 = vector.load %arg2[%c0_1, %c0_2] : memref<32x50xf32, #tpu.memory_space<vmem>>, vector<32x50xf32>
    %c0_3 = arith.constant 0 : index
    %c0_4 = arith.constant 0 : index
    %2 = vector.load %arg3[%c0_3, %c0_4] : memref<1x50xf32, #tpu.memory_space<vmem>>, vector<1x50xf32>
    %cst = arith.constant dense<0.000000e+00> : vector<2x50xf32>
    %3 = tpu.matmul %0, %1, %cst {dimension_numbers = #tpu.dot_dimension_numbers<[1], [0], [0], [1], [0, 0, 1, 1], [], []>} : vector<2x32xf32>, vector<32x50xf32>, vector<2x50xf32> -> vector<2x50xf32>
    %4 = vector.broadcast %2 : vector<1x50xf32> to vector<2x50xf32>
    %5 = arith.addf %3, %4 : vector<2x50xf32>
    %cst_5 = arith.constant 0.000000e+00 : f32
    %6 = vector.broadcast %cst_5 : f32 to vector<2x50xf32>
    %7 = arith.maximumf %5, %6 : vector<2x50xf32>
    %c0_6 = arith.constant 0 : index
    %c0_7 = arith.constant 0 : index
    %8 = vector.load %arg4[%c0_6, %c0_7] : memref<50x50xf32, #tpu.memory_space<vmem>>, vector<50x50xf32>
    %c0_8 = arith.constant 0 : index
    %c0_9 = arith.constant 0 : index
    %9 = vector.load %arg5[%c0_8, %c0_9] : memref<1x50xf32, #tpu.memory_space<vmem>>, vector<1x50xf32>
    %cst_10 = arith.constant dense<0.000000e+00> : vector<2x50xf32>
    %10 = tpu.matmul %7, %8, %cst_10 {dimension_numbers = #tpu.dot_dimension_numbers<[1], [0], [0], [1], [0, 0, 1, 1], [], []>} : vector<2x50xf32>, vector<50x50xf32>, vector<2x50xf32> -> vector<2x50xf32>
    %11 = vector.broadcast %9 : vector<1x50xf32> to vector<2x50xf32>
    %12 = arith.addf %10, %11 : vector<2x50xf32>
    %cst_11 = arith.constant 0.000000e+00 : f32
    %13 = vector.broadcast %cst_11 : f32 to vector<2x50xf32>
    %14 = arith.maximumf %12, %13 : vector<2x50xf32>
    %c0_12 = arith.constant 0 : index
    %c0_13 = arith.constant 0 : index
    %15 = vector.load %arg6[%c0_12, %c0_13] : memref<50x3xf32, #tpu.memory_space<vmem>>, vector<50x3xf32>
    %c0_14 = arith.constant 0 : index
    %c0_15 = arith.constant 0 : index
    %16 = vector.load %arg7[%c0_14, %c0_15] : memref<1x3xf32, #tpu.memory_space<vmem>>, vector<1x3xf32>
    %cst_16 = arith.constant dense<0.000000e+00> : vector<2x3xf32>
    %17 = tpu.matmul %14, %15, %cst_16 {dimension_numbers = #tpu.dot_dimension_numbers<[1], [0], [0], [1], [0, 0, 1, 1], [], []>} : vector<2x50xf32>, vector<50x3xf32>, vector<2x3xf32> -> vector<2x3xf32>
    %18 = vector.broadcast %16 : vector<1x3xf32> to vector<2x3xf32>
    %19 = arith.addf %17, %18 : vector<2x3xf32>
    %c0_17 = arith.constant 0 : index
    %c0_18 = arith.constant 0 : index
    %20 = vector.load %arg8[%c0_17, %c0_18] : memref<2x3xf32, #tpu.memory_space<vmem>>, vector<2x3xf32>
    tpu.vector_store %arg8[%c0_17, %c0_18], %19 {strides = array<i32>} : memref<2x3xf32, #tpu.memory_space<vmem>>, vector<2x3xf32>,
    return
  }
  func.func @transform_0(%arg0: i32) -> (i32, i32) {
    %c0_i32 = arith.constant 0 : i32
    %c0_i32_0 = arith.constant 0 : i32
    return %arg0, %c0_i32 : i32, i32
  }
  func.func @transform_1(%arg0: i32) -> (i32, i32) {
    %c0_i32 = arith.constant 0 : i32
    %c0_i32_0 = arith.constant 0 : i32
    %c0_i32_1 = arith.constant 0 : i32
    return %c0_i32, %c0_i32_0 : i32, i32
  }
  func.func @transform_2(%arg0: i32) -> (i32, i32) {
    %c0_i32 = arith.constant 0 : i32
    %c0_i32_0 = arith.constant 0 : i32
    %c0_i32_1 = arith.constant 0 : i32
    return %c0_i32, %c0_i32_0 : i32, i32
  }
  func.func @transform_3(%arg0: i32) -> (i32, i32) {
    %c0_i32 = arith.constant 0 : i32
    %c0_i32_0 = arith.constant 0 : i32
    %c0_i32_1 = arith.constant 0 : i32
    return %c0_i32, %c0_i32_0 : i32, i32
  }
  func.func @transform_4(%arg0: i32) -> (i32, i32) {
    %c0_i32 = arith.constant 0 : i32
    %c0_i32_0 = arith.constant 0 : i32
    %c0_i32_1 = arith.constant 0 : i32
    return %c0_i32, %c0_i32_0 : i32, i32
  }
  func.func @transform_5(%arg0: i32) -> (i32, i32) {
    %c0_i32 = arith.constant 0 : i32
    %c0_i32_0 = arith.constant 0 : i32
    %c0_i32_1 = arith.constant 0 : i32
    return %c0_i32, %c0_i32_0 : i32, i32
  }
  func.func @transform_6(%arg0: i32) -> (i32, i32) {
    %c0_i32 = arith.constant 0 : i32
    %c0_i32_0 = arith.constant 0 : i32
    %c0_i32_1 = arith.constant 0 : i32
    return %c0_i32, %c0_i32_0 : i32, i32
  }
  func.func @transform_7(%arg0: i32) -> (i32, i32) {
    %c0_i32 = arith.constant 0 : i32
    %c0_i32_0 = arith.constant 0 : i32
    return %arg0, %c0_i32 : i32, i32
  }
}

</mosaic_0001>

<llo_original>
// kernel: _lambda_.1
$region0: #{_lambda_.1}
  #allocation0 [shape = 'u32[]', space=smem, size = 0x4, offset = 0x4, fixed_abs, tag = 'smem constant byte address 0x4 - core index']
  #allocation1 [shape = 'u32[144,128]{1,0:T(1,128)}', space=vmem, size = 0x12000, scoped, tag = 'internal scratch']
  %s0 = inlined_call_operand.vmem [shape: f32[2,32], index: 0, kind: input, shape index: {}]
  %s1 = inlined_call_operand.hbm [shape: f32[32,50], index: 1, kind: input, shape index: {}]
  %s2 = inlined_call_operand.vmem [shape: f32[1,50], index: 2, kind: input, shape index: {}]
  %s3 = inlined_call_operand.hbm [shape: f32[50,50], index: 3, kind: input, shape index: {}]
  %s4 = inlined_call_operand.vmem [shape: f32[1,50], index: 4, kind: input, shape index: {}]
  %s5 = inlined_call_operand.hbm [shape: f32[50,3], index: 5, kind: input, shape index: {}]
  %s6 = inlined_call_operand.vmem [shape: f32[1,3], index: 6, kind: input, shape index: {}]
  %s7 = inlined_call_operand.hbm [shape: f32[2,3], index: 7, kind: output, shape index: {}]
  %s8 = sld [smem:[#allocation0]]
  $region50: #{_lambda_.1} parent=0
    _
  %s10 = ssub.s32 1, %s8
  %s11 = scalar_select 0, %s10, %s8
  $region1: #{_lambda_.1} parent=0
    #allocation2 [shape = 'u8[16384]{0}', space=vmem, size = 0x4000, scoped, tag = 'input window, operand 1, single buffered']
    #allocation3 [shape = 's32[1]{0}', space=sflag, size = 0x4, scoped, tag = 'scoped memory for _lambda_.1']
    #allocation4 [shape = 's32[1]{0}', space=sflag, size = 0x4, scoped, tag = 'scoped memory for _lambda_.1']
    #allocation5 [shape = 'u8[28672]{0}', space=vmem, size = 0x7000, scoped, tag = 'input window, operand 3, single buffered']
    #allocation6 [shape = 's32[1]{0}', space=sflag, size = 0x4, scoped, tag = 'scoped memory for _lambda_.1']
    #allocation7 [shape = 'u8[28672]{0}', space=vmem, size = 0x7000, scoped, tag = 'input window, operand 5, single buffered']
    #allocation8 [shape = 'u8[1024]{0}', space=vmem, size = 0x400, scoped, tag = 'output window, operand 0, single buffered']
    %12 = vsyncpa [#allocation3], 0
    %13 = vsyncpa [#allocation6], 0
    %14 = vsyncpa [#allocation4], 0
    // Predicated region
    $region2: #{_lambda_.1} parent=1 // pred_check
      _
    $region3: #{_lambda_.1} parent=1 // pred_check_branch
      %16 = sbr.rel (0) target = $region5
    $region4: #{_lambda_.1} parent=1 // pred_region
      _
    $region5: #{_lambda_.1} parent=1 // pred_fallthru
      _
    // Predicated region
    $region6: #{_lambda_.1} parent=1 // pred_check
      _
    $region7: #{_lambda_.1} parent=1 // pred_check_branch
      %18 = sbr.rel (0) target = $region9
    $region8: #{_lambda_.1} parent=1 // pred_region
      %s20 = ssub.s32 512, 512
      %21 = vsyncadd [#allocation3], %s20
      %s22 = sshll.u32 [#allocation2], 4
      %s23 = int_to_ptr.vmem [resolvable:$true] %s22
      %28 = dma.hbm_to_vmem [thread:$0]  %s1, 512, %s23, [#allocation3], 128, 128, 8
    $region9: #{_lambda_.1} parent=1 // pred_fallthru
      _
    // Predicated region
    $region10: #{_lambda_.1} parent=1 // pred_check
      _
    $region11: #{_lambda_.1} parent=1 // pred_check_branch
      %30 = sbr.rel (0) target = $region13
    $region12: #{_lambda_.1} parent=1 // pred_region
      _
    $region13: #{_lambda_.1} parent=1 // pred_fallthru
      _
    // Predicated region
    $region14: #{_lambda_.1} parent=1 // pred_check
      _
    $region15: #{_lambda_.1} parent=1 // pred_check_branch
      %32 = sbr.rel (0) target = $region17
    $region16: #{_lambda_.1} parent=1 // pred_region
      %s34 = ssub.s32 896, 896
      %35 = vsyncadd [#allocation6], %s34
      %s36 = sshll.u32 [#allocation5], 4
      %s37 = int_to_ptr.vmem [resolvable:$true] %s36
      %42 = dma.hbm_to_vmem [thread:$0]  %s3, 896, %s37, [#allocation6], 128, 128, 8
    $region17: #{_lambda_.1} parent=1 // pred_fallthru
      _
    // Predicated region
    $region18: #{_lambda_.1} parent=1 // pred_check
      _
    $region19: #{_lambda_.1} parent=1 // pred_check_branch
      %44 = sbr.rel (0) target = $region21
    $region20: #{_lambda_.1} parent=1 // pred_region
      _
    $region21: #{_lambda_.1} parent=1 // pred_fallthru
      _
    // Predicated region
    $region22: #{_lambda_.1} parent=1 // pred_check
      _
    $region23: #{_lambda_.1} parent=1 // pred_check_branch
      %46 = sbr.rel (0) target = $region25
    $region24: #{_lambda_.1} parent=1 // pred_region
      %s48 = ssub.s32 896, 896
      %49 = vsyncadd [#allocation6], %s48
      %s50 = sshll.u32 [#allocation7], 4
      %s51 = int_to_ptr.vmem [resolvable:$true] %s50
      %56 = dma.hbm_to_vmem [thread:$0]  %s5, 896, %s51, [#allocation6], 128, 128, 8
    $region25: #{_lambda_.1} parent=1 // pred_fallthru
      _
    // Predicated region
    $region26: #{_lambda_.1} parent=1 // pred_check
      _
    $region27: #{_lambda_.1} parent=1 // pred_check_branch
      %58 = sbr.rel (0) target = $region29
    $region28: #{_lambda_.1} parent=1 // pred_region
      _
    $region29: #{_lambda_.1} parent=1 // pred_fallthru
      _
    // Predicated region
    $region30: #{_lambda_.1} parent=1 // pred_check
      _
    $region31: #{_lambda_.1} parent=1 // pred_check_branch
      %60 = sbr.rel (0) target = $region33
    $region32: #{_lambda_.1} parent=1 // pred_region
      %61 = dma.done [#allocation3], 512
    $region33: #{_lambda_.1} parent=1 // pred_fallthru
      _
    // Predicated region
    $region34: #{_lambda_.1} parent=1 // pred_check
      _
    $region35: #{_lambda_.1} parent=1 // pred_check_branch
      %63 = sbr.rel (0) target = $region37
    $region36: #{_lambda_.1} parent=1 // pred_region
      %64 = dma.done [#allocation6], 896
    $region37: #{_lambda_.1} parent=1 // pred_fallthru
      _
    // Predicated region
    $region38: #{_lambda_.1} parent=1 // pred_check
      _
    $region39: #{_lambda_.1} parent=1 // pred_check_branch
      %66 = sbr.rel (0) target = $region41
    $region40: #{_lambda_.1} parent=1 // pred_region
      %67 = dma.done [#allocation6], 896
    $region41: #{_lambda_.1} parent=1 // pred_fallthru
      _
    %v68 = vld [vmem:[%s0] sm:$0x3]
    %v69 = vld [vmem:[#allocation2] sm:$0xff]
    %v70 = vld [vmem:[#allocation2 + $0x8] sm:$0xff]
    %v71 = vld [vmem:[#allocation2 + $0x10] sm:$0xff]
    %v72 = vld [vmem:[#allocation2 + $0x18] sm:$0xff]
    %v73 = vld [vmem:[%s2] sm:$0x1]
    %v75 = vlaneseq
    %v76 = vshrl.u32 %v75, 7
    %v77 = vsub.s32 0, %v76
    %v78 = vrot.slane %v73, %v77
    %vm80 = vcmask 261120
    %v82 = vsel %vm80, %v68, 0
    %84 = vmatprep.subr.mxu0 0.0
    %85 = vmatpush1.msra.mxu0 0.0
    %86 = vmatprep.subr.mxu0 0.0
    %87 = vmatpush1.msra.mxu0 0.0
    %88 = vmatprep.subr.mxu0 0.0
    %89 = vmatpush1.msra.mxu0 0.0
    %90 = vmatprep.subr.mxu0 0.0
    %91 = vmatpush1.msra.mxu0 0.0
    %92 = vmatprep.subr.mxu0 0.0
    %93 = vmatpush1.msra.mxu0 0.0
    %94 = vmatprep.subr.mxu0 0.0
    %95 = vmatpush1.msra.mxu0 0.0
    %96 = vmatprep.subr.mxu0 0.0
    %97 = vmatpush1.msra.mxu0 0.0
    %98 = vmatprep.subr.mxu0 0.0
    %99 = vmatpush1.msra.mxu0 0.0
    %100 = vmatprep.subr.mxu0 0.0
    %101 = vmatpush1.msra.mxu0 0.0
    %102 = vmatprep.subr.mxu0 0.0
    %103 = vmatpush1.msra.mxu0 0.0
    %104 = vmatprep.subr.mxu0 0.0
    %105 = vmatpush1.msra.mxu0 0.0
    %106 = vmatprep.subr.mxu0 0.0
    %107 = vmatpush1.msra.mxu0 0.0
    %108 = vmatprep.subr.mxu0 0.0
    %109 = vmatpush1.msra.mxu0 %v72
    %110 = vmatprep.subr.mxu0 0.0
    %111 = vmatpush1.msra.mxu0 %v71
    %112 = vmatprep.subr.mxu0 0.0
    %113 = vmatpush1.msra.mxu0 %v70
    %114 = vmatprep.subr.mxu0 0.0
    %115 = vmatpush1.msra.mxu0 %v69
    %116 = vmatprep.subr.mxu0 0.0
    %117 = vmatpush2.msra.mxu0 0.0
    %118 = vmatprep.subr.mxu0 0.0
    %119 = vmatpush2.msra.mxu0 0.0
    %120 = vmatprep.subr.mxu0 0.0
    %121 = vmatpush2.msra.mxu0 0.0
    %122 = vmatprep.subr.mxu0 0.0
    %123 = vmatpush2.msra.mxu0 0.0
    %124 = vmatprep.subr.mxu0 0.0
    %125 = vmatpush2.msra.mxu0 0.0
    %126 = vmatprep.subr.mxu0 0.0
    %127 = vmatpush2.msra.mxu0 0.0
    %128 = vmatprep.subr.mxu0 0.0
    %129 = vmatpush2.msra.mxu0 0.0
    %130 = vmatprep.subr.mxu0 0.0
    %131 = vmatpush2.msra.mxu0 0.0
    %132 = vmatprep.subr.mxu0 0.0
    %133 = vmatpush2.msra.mxu0 0.0
    %134 = vmatprep.subr.mxu0 0.0
    %135 = vmatpush2.msra.mxu0 0.0
    %136 = vmatprep.subr.mxu0 0.0
    %137 = vmatpush2.msra.mxu0 0.0
    %138 = vmatprep.subr.mxu0 0.0
    %139 = vmatpush2.msra.mxu0 0.0
    %140 = vmatprep.subr.mxu0 0.0
    %141 = vmatpush2.msra.mxu0 0.0
    %142 = vmatprep.subr.mxu0 0.0
    %143 = vmatpush2.msra.mxu0 0.0
    %144 = vmatprep.subr.mxu0 0.0
    %145 = vmatpush2.msra.mxu0 0.0
    %146 = vmatprep.subr.mxu0 0.0
    %147 = vmatpush2.msra.mxu0 0.0
    %148 = vmatprep.mubr.f32.mxu0 0.0
    %149 = vmatmul.mubr.f32.gmra.mxu0 %v82
    %v150 = vpop.f32.mrf.mxu0
    %v151 = vadd.f32 %v78, %v150
    %v152 = vpop.f32.mrf.mxu0
    %153 = vdwg.mxu0
    %v154 = vmax.f32 %v151, 0.0
    %v155 = vld [vmem:[#allocation5] sm:$0xff]
    %v156 = vld [vmem:[#allocation5 + $0x8] sm:$0xff]
    %v157 = vld [vmem:[#allocation5 + $0x10] sm:$0xff]
    %v158 = vld [vmem:[#allocation5 + $0x18] sm:$0xff]
    %v159 = vld [vmem:[#allocation5 + $0x20] sm:$0xff]
    %v160 = vld [vmem:[#allocation5 + $0x28] sm:$0xff]
    %v161 = vld [vmem:[#allocation5 + $0x30] sm:$0x3]
    %v162 = vld [vmem:[%s4] sm:$0x1]
    %v164 = vlaneseq
    %v165 = vshrl.u32 %v164, 7
    %v166 = vsub.s32 0, %v165
    %v167 = vrot.slane %v162, %v166
    %vm169 = vcmask 408576
    %v171 = vsel %vm169, %v154, 0
    %vm173 = vcmask 1041408
    %v175 = vsel %vm173, %v161, 0
    %177 = vmatprep.subr.mxu0 0.0
    %178 = vmatpush1.msra.mxu0 0.0
    %179 = vmatprep.subr.mxu0 0.0
    %180 = vmatpush1.msra.mxu0 0.0
    %181 = vmatprep.subr.mxu0 0.0
    %182 = vmatpush1.msra.mxu0 0.0
    %183 = vmatprep.subr.mxu0 0.0
    %184 = vmatpush1.msra.mxu0 0.0
    %185 = vmatprep.subr.mxu0 0.0
    %186 = vmatpush1.msra.mxu0 0.0
    %187 = vmatprep.subr.mxu0 0.0
    %188 = vmatpush1.msra.mxu0 0.0
    %189 = vmatprep.subr.mxu0 0.0
    %190 = vmatpush1.msra.mxu0 0.0
    %191 = vmatprep.subr.mxu0 0.0
    %192 = vmatpush1.msra.mxu0 0.0
    %193 = vmatprep.subr.mxu0 0.0
    %194 = vmatpush1.msra.mxu0 0.0
    %195 = vmatprep.subr.mxu0 0.0
    %196 = vmatpush1.msra.mxu0 %v175
    %197 = vmatprep.subr.mxu0 0.0
    %198 = vmatpush1.msra.mxu0 %v160
    %199 = vmatprep.subr.mxu0 0.0
    %200 = vmatpush1.msra.mxu0 %v159
    %201 = vmatprep.subr.mxu0 0.0
    %202 = vmatpush1.msra.mxu0 %v158
    %203 = vmatprep.subr.mxu0 0.0
    %204 = vmatpush1.msra.mxu0 %v157
    %205 = vmatprep.subr.mxu0 0.0
    %206 = vmatpush1.msra.mxu0 %v156
    %207 = vmatprep.subr.mxu0 0.0
    %208 = vmatpush1.msra.mxu0 %v155
    %209 = vmatprep.subr.mxu0 0.0
    %210 = vmatpush2.msra.mxu0 0.0
    %211 = vmatprep.subr.mxu0 0.0
    %212 = vmatpush2.msra.mxu0 0.0
    %213 = vmatprep.subr.mxu0 0.0
    %214 = vmatpush2.msra.mxu0 0.0
    %215 = vmatprep.subr.mxu0 0.0
    %216 = vmatpush2.msra.mxu0 0.0
    %217 = vmatprep.subr.mxu0 0.0
    %218 = vmatpush2.msra.mxu0 0.0
    %219 = vmatprep.subr.mxu0 0.0
    %220 = vmatpush2.msra.mxu0 0.0
    %221 = vmatprep.subr.mxu0 0.0
    %222 = vmatpush2.msra.mxu0 0.0
    %223 = vmatprep.subr.mxu0 0.0
    %224 = vmatpush2.msra.mxu0 0.0
    %225 = vmatprep.subr.mxu0 0.0
    %226 = vmatpush2.msra.mxu0 0.0
    %227 = vmatprep.subr.mxu0 0.0
    %228 = vmatpush2.msra.mxu0 0.0
    %229 = vmatprep.subr.mxu0 0.0
    %230 = vmatpush2.msra.mxu0 0.0
    %231 = vmatprep.subr.mxu0 0.0
    %232 = vmatpush2.msra.mxu0 0.0
    %233 = vmatprep.subr.mxu0 0.0
    %234 = vmatpush2.msra.mxu0 0.0
    %235 = vmatprep.subr.mxu0 0.0
    %236 = vmatpush2.msra.mxu0 0.0
    %237 = vmatprep.subr.mxu0 0.0
    %238 = vmatpush2.msra.mxu0 0.0
    %239 = vmatprep.subr.mxu0 0.0
    %240 = vmatpush2.msra.mxu0 0.0
    %241 = vmatprep.mubr.f32.mxu0 0.0
    %242 = vmatmul.mubr.f32.gmra.mxu0 %v171
    %v243 = vpop.f32.mrf.mxu0
    %v244 = vadd.f32 %v167, %v243
    %v245 = vpop.f32.mrf.mxu0
    %246 = vdwg.mxu0
    %v247 = vmax.f32 %v244, 0.0
    %v248 = vld [vmem:[#allocation7] sm:$0xff]
    %v249 = vld [vmem:[#allocation7 + $0x8] sm:$0xff]
    %v250 = vld [vmem:[#allocation7 + $0x10] sm:$0xff]
    %v251 = vld [vmem:[#allocation7 + $0x18] sm:$0xff]
    %v252 = vld [vmem:[#allocation7 + $0x20] sm:$0xff]
    %v253 = vld [vmem:[#allocation7 + $0x28] sm:$0xff]
    %v254 = vld [vmem:[#allocation7 + $0x30] sm:$0x3]
    %v255 = vld [vmem:[%s6] sm:$0x1]
    %v257 = vlaneseq
    %v258 = vshrl.u32 %v257, 7
    %v259 = vsub.s32 0, %v258
    %v260 = vrot.slane %v255, %v259
    %v263 = vsel %vm169, %v247, 0
    %v266 = vsel %vm173, %v254, 0
    %268 = vmatprep.subr.mxu0 0.0
    %269 = vmatpush1.msra.mxu0 0.0
    %270 = vmatprep.subr.mxu0 0.0
    %271 = vmatpush1.msra.mxu0 0.0
    %272 = vmatprep.subr.mxu0 0.0
    %273 = vmatpush1.msra.mxu0 0.0
    %274 = vmatprep.subr.mxu0 0.0
    %275 = vmatpush1.msra.mxu0 0.0
    %276 = vmatprep.subr.mxu0 0.0
    %277 = vmatpush1.msra.mxu0 0.0
    %278 = vmatprep.subr.mxu0 0.0
    %279 = vmatpush1.msra.mxu0 0.0
    %280 = vmatprep.subr.mxu0 0.0
    %281 = vmatpush1.msra.mxu0 0.0
    %282 = vmatprep.subr.mxu0 0.0
    %283 = vmatpush1.msra.mxu0 0.0
    %284 = vmatprep.subr.mxu0 0.0
    %285 = vmatpush1.msra.mxu0 0.0
    %286 = vmatprep.subr.mxu0 0.0
    %287 = vmatpush1.msra.mxu0 %v266
    %288 = vmatprep.subr.mxu0 0.0
    %289 = vmatpush1.msra.mxu0 %v253
    %290 = vmatprep.subr.mxu0 0.0
    %291 = vmatpush1.msra.mxu0 %v252
    %292 = vmatprep.subr.mxu0 0.0
    %293 = vmatpush1.msra.mxu0 %v251
    %294 = vmatprep.subr.mxu0 0.0
    %295 = vmatpush1.msra.mxu0 %v250
    %296 = vmatprep.subr.mxu0 0.0
    %297 = vmatpush1.msra.mxu0 %v249
    %298 = vmatprep.subr.mxu0 0.0
    %299 = vmatpush1.msra.mxu0 %v248
    %300 = vmatprep.subr.mxu0 0.0
    %301 = vmatpush2.msra.mxu0 0.0
    %302 = vmatprep.subr.mxu0 0.0
    %303 = vmatpush2.msra.mxu0 0.0
    %304 = vmatprep.subr.mxu0 0.0
    %305 = vmatpush2.msra.mxu0 0.0
    %306 = vmatprep.subr.mxu0 0.0
    %307 = vmatpush2.msra.mxu0 0.0
    %308 = vmatprep.subr.mxu0 0.0
    %309 = vmatpush2.msra.mxu0 0.0
    %310 = vmatprep.subr.mxu0 0.0
    %311 = vmatpush2.msra.mxu0 0.0
    %312 = vmatprep.subr.mxu0 0.0
    %313 = vmatpush2.msra.mxu0 0.0
    %314 = vmatprep.subr.mxu0 0.0
    %315 = vmatpush2.msra.mxu0 0.0
    %316 = vmatprep.subr.mxu0 0.0
    %317 = vmatpush2.msra.mxu0 0.0
    %318 = vmatprep.subr.mxu0 0.0
    %319 = vmatpush2.msra.mxu0 0.0
    %320 = vmatprep.subr.mxu0 0.0
    %321 = vmatpush2.msra.mxu0 0.0
    %322 = vmatprep.subr.mxu0 0.0
    %323 = vmatpush2.msra.mxu0 0.0
    %324 = vmatprep.subr.mxu0 0.0
    %325 = vmatpush2.msra.mxu0 0.0
    %326 = vmatprep.subr.mxu0 0.0
    %327 = vmatpush2.msra.mxu0 0.0
    %328 = vmatprep.subr.mxu0 0.0
    %329 = vmatpush2.msra.mxu0 0.0
    %330 = vmatprep.subr.mxu0 0.0
    %331 = vmatpush2.msra.mxu0 0.0
    %332 = vmatprep.mubr.f32.mxu0 0.0
    %333 = vmatmul.mubr.f32.gmra.mxu0 %v263
    %v334 = vpop.f32.mrf.mxu0
    %v335 = vadd.f32 %v260, %v334
    %v336 = vpop.f32.mrf.mxu0
    %337 = vdwg.mxu0
    %vm338 = vcmask 17408
    %339 = vst.msk [vmem:[#allocation8] sm:$0x3] %vm338, %v335
    // Predicated region
    $region42: #{_lambda_.1} parent=1 // pred_check
      _
    $region43: #{_lambda_.1} parent=1 // pred_check_branch
      %341 = sbr.rel (0) target = $region45
    $region44: #{_lambda_.1} parent=1 // pred_region
      %s343 = ssub.s32 32, 32
      %344 = vsyncadd [#allocation4], %s343
      %s346 = sshll.u32 [#allocation8], 4
      %s347 = int_to_ptr.vmem [resolvable:$true] %s346
      %349 = dma.vmem_to_hbm [thread:$0]  %s347, 32, %s7, [#allocation4]
    $region45: #{_lambda_.1} parent=1 // pred_fallthru
      _
    // Predicated region
    $region46: #{_lambda_.1} parent=1 // pred_check
      _
    $region47: #{_lambda_.1} parent=1 // pred_check_branch
      %351 = sbr.rel (0) target = $region49
    $region48: #{_lambda_.1} parent=1 // pred_region
      %352 = dma.done [#allocation4], 32
    $region49: #{_lambda_.1} parent=1 // pred_fallthru
      _
    %353 = vsyncpa [#allocation3], 1
    %354 = vsyncpa [#allocation6], 1
    %355 = vsyncpa [#allocation4], 1

</llo_original>
